<compile_context>
chip_gen: v7x
topology: tpu7x:2x2x1
jax: 0.10.0
libtpu: 0.0.40
codegen_flags: <defaults>
</compile_context>

<pallas_src>
import functools

import jax
import jax.numpy as jnp
from jax import lax
from jax.experimental import pallas as pl
from jax.experimental.pallas import tpu as pltpu


def _encoder_kernel(ids_ref, table_ref, bias_ref, o_ref, *, batch, seq):
    # ids_ref:   SMEM (B, S)      int32   token ids
    # table_ref: VMEM (V_pad, Hp) f32     fused table T' = E @ W^T (zero padded)
    # bias_ref:  VMEM (1, Hp)     f32     Linear bias (zero padded)
    # o_ref:     VMEM (B, Hp)     f32
    bias = bias_ref[...]                                         # (1, Hp)

    for b in range(batch):                                       # tiny, static
        # Gather the first token's fused row as the running-max init.
        acc0 = table_ref[pl.ds(ids_ref[b, 0], 1), :]             # (1, Hp)

        def seq_step(s, acc):
            row = table_ref[pl.ds(ids_ref[b, s], 1), :]          # dynamic gather
            return jnp.maximum(acc, row)

        pooled = lax.fori_loop(1, seq, seq_step, acc0, unroll=True)
        o_ref[pl.ds(b, 1), :] = (pooled + bias).astype(o_ref.dtype)


def prepare_sentence_encoder_params(emb_table, w, b):
    """One-time parameter prep (hoisted out of the per-call forward path).

    Folds the Linear weight into the embedding table and pads everything to
    (8, 128)-aligned shapes so the kernel sees full, lane-dense tiles.
    """
    V, H = emb_table.shape
    Hp = ((H + 127) // 128) * 128
    Vp = ((V + 7) // 8) * 8

    fused = jnp.dot(emb_table.astype(jnp.float32), w.astype(jnp.float32).T,
                    precision=lax.Precision.HIGHEST)              # (V, H)
    fused = jnp.pad(fused, ((0, Vp - V), (0, Hp - H)))            # (Vp, Hp)
    bias = jnp.pad(b.astype(jnp.float32).reshape(1, H),
                   ((0, 0), (0, Hp - H)))                         # (1, Hp)
    return fused, bias


def sentence_encoder_forward(token_ids, fused_table, bias, hidden_size,
                             out_dtype=jnp.float32):
    """token_ids: (B, S) int; fused_table: (Vp, Hp); bias: (1, Hp)."""
    B, S = token_ids.shape
    _, Hp = fused_table.shape
    ids = token_ids.astype(jnp.int32)                             # only per-call op

    out = pl.pallas_call(
        functools.partial(_encoder_kernel, batch=B, seq=S),
        out_shape=jax.ShapeDtypeStruct((B, Hp), jnp.float32),
        in_specs=[
            pl.BlockSpec(memory_space=pltpu.MemorySpace.SMEM),    # token ids
            pl.BlockSpec(memory_space=pltpu.MemorySpace.VMEM),    # fused table
            pl.BlockSpec(memory_space=pltpu.MemorySpace.VMEM),    # bias
        ],
        out_specs=pl.BlockSpec(memory_space=pltpu.MemorySpace.VMEM),
        # Explicit (generous) VMEM budget; actual resident footprint is < 64 KiB,
        # well inside every chip's scoped limit (incl. v7x's 64 MiB physical).
        compiler_params=pltpu.CompilerParams(vmem_limit_bytes=4 * 1024 * 1024),
    )(ids, fused_table, bias)

    return out[:, :hidden_size].astype(out_dtype)


def _reference_forward(token_ids, emb_table, w, b):
    emb = jnp.take(emb_table, token_ids, axis=0)
    y = jnp.einsum("bsh,oh->bso", emb, w,
                   precision=lax.Precision.HIGHEST) + b
    return jnp.max(y, axis=1)


if __name__ == "__main__":
    # Config-implied small shapes.
    hidden_size = 32
    vocab_size = 64            # config['vocab_size']; table has vocab_size + 1 rows
    batch = 2
    seq = 8                    # <= max_length

    key = jax.random.PRNGKey(0)
    k_emb, k_w, k_b, k_ids = jax.random.split(key, 4)

    emb_table = jax.random.normal(
        k_emb, (vocab_size + 1, hidden_size), dtype=jnp.float32) * 0.1
    # padding_idx=0: zero the padding row, as nn.Embedding(padding_idx=0) does.
    emb_table = emb_table.at[0].set(0.0)

    w = jax.random.normal(k_w, (hidden_size, hidden_size), dtype=jnp.float32) * 0.1
    b = jax.random.normal(k_b, (hidden_size,), dtype=jnp.float32) * 0.1

    token_ids = jax.random.randint(
        k_ids, (batch, seq), minval=0, maxval=vocab_size + 1, dtype=jnp.int32)

    # One-time parameter prep (would be cached alongside the model params).
    fused_table, bias = prepare_sentence_encoder_params(emb_table, w, b)
    fused_table, bias = jax.block_until_ready((fused_table, bias))

    out = sentence_encoder_forward(token_ids, fused_table, bias,
                                   hidden_size, emb_table.dtype)
    out = jax.block_until_ready(out)

    ref = _reference_forward(token_ids, emb_table, w, b)
    assert out.shape == (batch, hidden_size)
    assert jnp.allclose(out, ref, atol=1e-5, rtol=1e-5), float(
        jnp.max(jnp.abs(out - ref)))

    print("KERNEL_OK")
</pallas_src>

<mosaic_0001>
module attributes {stable_mosaic.version = 11 : i64} {
  func.func @_encoder_kernel(%arg0: memref<2x8xi32, #tpu.memory_space<smem>>, %arg1: memref<72x128xf32, #tpu.memory_space<vmem>>, %arg2: memref<1x128xf32, #tpu.memory_space<vmem>>, %arg3: memref<2x128xf32, #tpu.memory_space<vmem>>) attributes {dimension_semantics = [], scalar_prefetch = 0 : i64, scratch_operands = 0 : i64, tpu.core_type = #tpu.core_type<tc>} {
    %c0 = arith.constant 0 : index
    %c0_0 = arith.constant 0 : index
    %0 = vector.load %arg2[%c0, %c0_0] : memref<1x128xf32, #tpu.memory_space<vmem>>, vector<1x128xf32>
    %c0_1 = arith.constant 0 : index
    %c0_2 = arith.constant 0 : index
    %1 = memref.load %arg0[%c0_1, %c0_2] : memref<2x8xi32, #tpu.memory_space<smem>>
    %2 = arith.index_cast %1 : i32 to index
    %c0_3 = arith.constant 0 : index
    %3 = vector.load %arg1[%2, %c0_3] : memref<72x128xf32, #tpu.memory_space<vmem>>, vector<1x128xf32>
    %c1_i32 = arith.constant 1 : i32
    %c0_4 = arith.constant 0 : index
    %4 = arith.index_cast %c1_i32 : i32 to index
    %5 = memref.load %arg0[%c0_4, %4] : memref<2x8xi32, #tpu.memory_space<smem>>
    %6 = arith.index_cast %5 : i32 to index
    %c0_5 = arith.constant 0 : index
    %7 = vector.load %arg1[%6, %c0_5] : memref<72x128xf32, #tpu.memory_space<vmem>>, vector<1x128xf32>
    %8 = arith.maximumf %3, %7 : vector<1x128xf32>
    %c2_i32 = arith.constant 2 : i32
    %c0_6 = arith.constant 0 : index
    %9 = arith.index_cast %c2_i32 : i32 to index
    %10 = memref.load %arg0[%c0_6, %9] : memref<2x8xi32, #tpu.memory_space<smem>>
    %11 = arith.index_cast %10 : i32 to index
    %c0_7 = arith.constant 0 : index
    %12 = vector.load %arg1[%11, %c0_7] : memref<72x128xf32, #tpu.memory_space<vmem>>, vector<1x128xf32>
    %13 = arith.maximumf %8, %12 : vector<1x128xf32>
    %c3_i32 = arith.constant 3 : i32
    %c0_8 = arith.constant 0 : index
    %14 = arith.index_cast %c3_i32 : i32 to index
    %15 = memref.load %arg0[%c0_8, %14] : memref<2x8xi32, #tpu.memory_space<smem>>
    %16 = arith.index_cast %15 : i32 to index
    %c0_9 = arith.constant 0 : index
    %17 = vector.load %arg1[%16, %c0_9] : memref<72x128xf32, #tpu.memory_space<vmem>>, vector<1x128xf32>
    %18 = arith.maximumf %13, %17 : vector<1x128xf32>
    %c4_i32 = arith.constant 4 : i32
    %c0_10 = arith.constant 0 : index
    %19 = arith.index_cast %c4_i32 : i32 to index
    %20 = memref.load %arg0[%c0_10, %19] : memref<2x8xi32, #tpu.memory_space<smem>>
    %21 = arith.index_cast %20 : i32 to index
    %c0_11 = arith.constant 0 : index
    %22 = vector.load %arg1[%21, %c0_11] : memref<72x128xf32, #tpu.memory_space<vmem>>, vector<1x128xf32>
    %23 = arith.maximumf %18, %22 : vector<1x128xf32>
    %c5_i32 = arith.constant 5 : i32
    %c0_12 = arith.constant 0 : index
    %24 = arith.index_cast %c5_i32 : i32 to index
    %25 = memref.load %arg0[%c0_12, %24] : memref<2x8xi32, #tpu.memory_space<smem>>
    %26 = arith.index_cast %25 : i32 to index
    %c0_13 = arith.constant 0 : index
    %27 = vector.load %arg1[%26, %c0_13] : memref<72x128xf32, #tpu.memory_space<vmem>>, vector<1x128xf32>
    %28 = arith.maximumf %23, %27 : vector<1x128xf32>
    %c6_i32 = arith.constant 6 : i32
    %c0_14 = arith.constant 0 : index
    %29 = arith.index_cast %c6_i32 : i32 to index
    %30 = memref.load %arg0[%c0_14, %29] : memref<2x8xi32, #tpu.memory_space<smem>>
    %31 = arith.index_cast %30 : i32 to index
    %c0_15 = arith.constant 0 : index
    %32 = vector.load %arg1[%31, %c0_15] : memref<72x128xf32, #tpu.memory_space<vmem>>, vector<1x128xf32>
    %33 = arith.maximumf %28, %32 : vector<1x128xf32>
    %c7_i32 = arith.constant 7 : i32
    %c0_16 = arith.constant 0 : index
    %34 = arith.index_cast %c7_i32 : i32 to index
    %35 = memref.load %arg0[%c0_16, %34] : memref<2x8xi32, #tpu.memory_space<smem>>
    %36 = arith.index_cast %35 : i32 to index
    %c0_17 = arith.constant 0 : index
    %37 = vector.load %arg1[%36, %c0_17] : memref<72x128xf32, #tpu.memory_space<vmem>>, vector<1x128xf32>
    %38 = arith.maximumf %33, %37 : vector<1x128xf32>
    %c7_i32_18 = arith.constant 7 : i32
    %39 = arith.addf %38, %0 : vector<1x128xf32>
    %c0_19 = arith.constant 0 : index
    %c0_20 = arith.constant 0 : index
    %40 = vector.load %arg3[%c0_19, %c0_20] : memref<2x128xf32, #tpu.memory_space<vmem>>, vector<1x128xf32>
    tpu.vector_store %arg3[%c0_19, %c0_20], %39 {strides = array<i32>} : memref<2x128xf32, #tpu.memory_space<vmem>>, vector<1x128xf32>,
    %c1 = arith.constant 1 : index
    %c0_21 = arith.constant 0 : index
    %41 = memref.load %arg0[%c1, %c0_21] : memref<2x8xi32, #tpu.memory_space<smem>>
    %42 = arith.index_cast %41 : i32 to index
    %c0_22 = arith.constant 0 : index
    %43 = vector.load %arg1[%42, %c0_22] : memref<72x128xf32, #tpu.memory_space<vmem>>, vector<1x128xf32>
    %c1_i32_23 = arith.constant 1 : i32
    %c1_24 = arith.constant 1 : index
    %44 = arith.index_cast %c1_i32_23 : i32 to index
    %45 = memref.load %arg0[%c1_24, %44] : memref<2x8xi32, #tpu.memory_space<smem>>
    %46 = arith.index_cast %45 : i32 to index
    %c0_25 = arith.constant 0 : index
    %47 = vector.load %arg1[%46, %c0_25] : memref<72x128xf32, #tpu.memory_space<vmem>>, vector<1x128xf32>
    %48 = arith.maximumf %43, %47 : vector<1x128xf32>
    %c2_i32_26 = arith.constant 2 : i32
    %c1_27 = arith.constant 1 : index
    %49 = arith.index_cast %c2_i32_26 : i32 to index
    %50 = memref.load %arg0[%c1_27, %49] : memref<2x8xi32, #tpu.memory_space<smem>>
    %51 = arith.index_cast %50 : i32 to index
    %c0_28 = arith.constant 0 : index
    %52 = vector.load %arg1[%51, %c0_28] : memref<72x128xf32, #tpu.memory_space<vmem>>, vector<1x128xf32>
    %53 = arith.maximumf %48, %52 : vector<1x128xf32>
    %c3_i32_29 = arith.constant 3 : i32
    %c1_30 = arith.constant 1 : index
    %54 = arith.index_cast %c3_i32_29 : i32 to index
    %55 = memref.load %arg0[%c1_30, %54] : memref<2x8xi32, #tpu.memory_space<smem>>
    %56 = arith.index_cast %55 : i32 to index
    %c0_31 = arith.constant 0 : index
    %57 = vector.load %arg1[%56, %c0_31] : memref<72x128xf32, #tpu.memory_space<vmem>>, vector<1x128xf32>
    %58 = arith.maximumf %53, %57 : vector<1x128xf32>
    %c4_i32_32 = arith.constant 4 : i32
    %c1_33 = arith.constant 1 : index
    %59 = arith.index_cast %c4_i32_32 : i32 to index
    %60 = memref.load %arg0[%c1_33, %59] : memref<2x8xi32, #tpu.memory_space<smem>>
    %61 = arith.index_cast %60 : i32 to index
    %c0_34 = arith.constant 0 : index
    %62 = vector.load %arg1[%61, %c0_34] : memref<72x128xf32, #tpu.memory_space<vmem>>, vector<1x128xf32>
    %63 = arith.maximumf %58, %62 : vector<1x128xf32>
    %c5_i32_35 = arith.constant 5 : i32
    %c1_36 = arith.constant 1 : index
    %64 = arith.index_cast %c5_i32_35 : i32 to index
    %65 = memref.load %arg0[%c1_36, %64] : memref<2x8xi32, #tpu.memory_space<smem>>
    %66 = arith.index_cast %65 : i32 to index
    %c0_37 = arith.constant 0 : index
    %67 = vector.load %arg1[%66, %c0_37] : memref<72x128xf32, #tpu.memory_space<vmem>>, vector<1x128xf32>
    %68 = arith.maximumf %63, %67 : vector<1x128xf32>
    %c6_i32_38 = arith.constant 6 : i32
    %c1_39 = arith.constant 1 : index
    %69 = arith.index_cast %c6_i32_38 : i32 to index
    %70 = memref.load %arg0[%c1_39, %69] : memref<2x8xi32, #tpu.memory_space<smem>>
    %71 = arith.index_cast %70 : i32 to index
    %c0_40 = arith.constant 0 : index
    %72 = vector.load %arg1[%71, %c0_40] : memref<72x128xf32, #tpu.memory_space<vmem>>, vector<1x128xf32>
    %73 = arith.maximumf %68, %72 : vector<1x128xf32>
    %c7_i32_41 = arith.constant 7 : i32
    %c1_42 = arith.constant 1 : index
    %74 = arith.index_cast %c7_i32_41 : i32 to index
    %75 = memref.load %arg0[%c1_42, %74] : memref<2x8xi32, #tpu.memory_space<smem>>
    %76 = arith.index_cast %75 : i32 to index
    %c0_43 = arith.constant 0 : index
    %77 = vector.load %arg1[%76, %c0_43] : memref<72x128xf32, #tpu.memory_space<vmem>>, vector<1x128xf32>
    %78 = arith.maximumf %73, %77 : vector<1x128xf32>
    %c7_i32_44 = arith.constant 7 : i32
    %79 = arith.addf %78, %0 : vector<1x128xf32>
    %c1_45 = arith.constant 1 : index
    %c0_46 = arith.constant 0 : index
    %80 = vector.load %arg3[%c1_45, %c0_46] : memref<2x128xf32, #tpu.memory_space<vmem>>, vector<1x128xf32>
    tpu.vector_store %arg3[%c1_45, %c0_46], %79 {strides = array<i32>} : memref<2x128xf32, #tpu.memory_space<vmem>>, vector<1x128xf32>,
    return
  }
}

</mosaic_0001>

<llo_original>
// kernel: tpu_custom_call.1
$region0: #{tpu_custom_call.1}
  #allocation0 [shape = 'u32[]', space=smem, size = 0x4, offset = 0x4, fixed_abs, tag = 'smem constant byte address 0x4 - core index']
  #allocation1 [shape = 'u32[144,128]{1,0:T(1,128)}', space=vmem, size = 0x12000, scoped, tag = 'internal scratch']
  %s0 = inlined_call_operand.hbm [shape: s32[2,8], index: 0, kind: input, shape index: {}]
  %s1 = inlined_call_operand.hbm [shape: f32[72,128], index: 1, kind: input, shape index: {}]
  %s2 = inlined_call_operand.vmem [shape: f32[1,128], index: 2, kind: input, shape index: {}]
  %s3 = inlined_call_operand.hbm [shape: f32[2,128], index: 3, kind: output, shape index: {}]
  %s4 = sld [smem:[#allocation0]]
  $region30: #{tpu_custom_call.1} parent=0
    _
  %s6 = ssub.s32 1, %s4
  %s7 = scalar_select 0, %s6, %s4
  $region1: #{tpu_custom_call.1} parent=0
    #allocation2 [shape = 'u8[1024]{0}', space=smem, size = 0x400, scoped, tag = 'input window, operand 0, single buffered']
    #allocation3 [shape = 's32[1]{0}', space=sflag, size = 0x4, scoped, tag = 'scoped memory for tpu_custom_call.1']
    #allocation4 [shape = 's32[1]{0}', space=sflag, size = 0x4, scoped, tag = 'scoped memory for tpu_custom_call.1']
    #allocation5 [shape = 's32[1]{0}', space=sflag, size = 0x4, scoped, tag = 'scoped memory for tpu_custom_call.1']
    #allocation6 [shape = 'u8[36864]{0}', space=vmem, size = 0x9000, scoped, tag = 'input window, operand 1, single buffered']
    #allocation7 [shape = 'u8[1024]{0}', space=vmem, size = 0x400, scoped, tag = 'output window, operand 0, single buffered']
    %8 = vsyncpa [#allocation5], 0
    %9 = vsyncpa [#allocation3], 0
    %10 = vsyncpa [#allocation4], 0
    // Predicated region
    $region2: #{tpu_custom_call.1} parent=1 // pred_check
      _
    $region3: #{tpu_custom_call.1} parent=1 // pred_check_branch
      %12 = sbr.rel (0) target = $region5
    $region4: #{tpu_custom_call.1} parent=1 // pred_region
      %s14 = ssub.s32 32, 32
      %15 = vsyncadd [#allocation5], %s14
      %18 = dma.hbm_to_smem %s0, 32, [#allocation2], [#allocation5]
    $region5: #{tpu_custom_call.1} parent=1 // pred_fallthru
      _
    // Predicated region
    $region6: #{tpu_custom_call.1} parent=1 // pred_check
      _
    $region7: #{tpu_custom_call.1} parent=1 // pred_check_branch
      %20 = sbr.rel (0) target = $region9
    $region8: #{tpu_custom_call.1} parent=1 // pred_region
      %s22 = ssub.s32 1152, 1152
      %23 = vsyncadd [#allocation3], %s22
      %s24 = sshll.u32 [#allocation6], 4
      %s25 = int_to_ptr.vmem [resolvable:$true] %s24
      %30 = dma.hbm_to_vmem [thread:$0]  %s1, 1152, %s25, [#allocation3], 128, 128, 8
    $region9: #{tpu_custom_call.1} parent=1 // pred_fallthru
      _
    // Predicated region
    $region10: #{tpu_custom_call.1} parent=1 // pred_check
      _
    $region11: #{tpu_custom_call.1} parent=1 // pred_check_branch
      %32 = sbr.rel (0) target = $region13
    $region12: #{tpu_custom_call.1} parent=1 // pred_region
      _
    $region13: #{tpu_custom_call.1} parent=1 // pred_fallthru
      _
    // Predicated region
    $region14: #{tpu_custom_call.1} parent=1 // pred_check
      _
    $region15: #{tpu_custom_call.1} parent=1 // pred_check_branch
      %34 = sbr.rel (0) target = $region17
    $region16: #{tpu_custom_call.1} parent=1 // pred_region
      %35 = dma.done [#allocation5], 32
    $region17: #{tpu_custom_call.1} parent=1 // pred_fallthru
      _
    // Predicated region
    $region18: #{tpu_custom_call.1} parent=1 // pred_check
      _
    $region19: #{tpu_custom_call.1} parent=1 // pred_check_branch
      %37 = sbr.rel (0) target = $region21
    $region20: #{tpu_custom_call.1} parent=1 // pred_region
      %38 = dma.done [#allocation3], 1152
    $region21: #{tpu_custom_call.1} parent=1 // pred_fallthru
      _
    %39 = sfence
    %v40 = vld [vmem:[%s2] sm:$0x1]
    %s41 = sld [smem:[#allocation2]]
    %s42 = scalar_lea.vmem [#allocation6], %s41
    %v43 = vld [vmem:[%s42] sm:$0x1]
    %s44 = sld [smem:[#allocation2 + $0x1]]
    %s45 = scalar_lea.vmem [#allocation6], %s44
    %v46 = vld [vmem:[%s45] sm:$0x1]
    %v47 = vmax.f32 %v43, %v46
    %s48 = sld [smem:[#allocation2 + $0x2]]
    %s49 = scalar_lea.vmem [#allocation6], %s48
    %v50 = vld [vmem:[%s49] sm:$0x1]
    %v51 = vmax.f32 %v47, %v50
    %s52 = sld [smem:[#allocation2 + $0x3]]
    %s53 = scalar_lea.vmem [#allocation6], %s52
    %v54 = vld [vmem:[%s53] sm:$0x1]
    %v55 = vmax.f32 %v51, %v54
    %s56 = sld [smem:[#allocation2 + $0x4]]
    %s57 = scalar_lea.vmem [#allocation6], %s56
    %v58 = vld [vmem:[%s57] sm:$0x1]
    %v59 = vmax.f32 %v55, %v58
    %s60 = sld [smem:[#allocation2 + $0x5]]
    %s61 = scalar_lea.vmem [#allocation6], %s60
    %v62 = vld [vmem:[%s61] sm:$0x1]
    %v63 = vmax.f32 %v59, %v62
    %s64 = sld [smem:[#allocation2 + $0x6]]
    %s65 = scalar_lea.vmem [#allocation6], %s64
    %v66 = vld [vmem:[%s65] sm:$0x1]
    %v67 = vmax.f32 %v63, %v66
    %s68 = sld [smem:[#allocation2 + $0x7]]
    %s69 = scalar_lea.vmem [#allocation6], %s68
    %v70 = vld [vmem:[%s69] sm:$0x1]
    %v71 = vmax.f32 %v67, %v70
    %v72 = vadd.f32 %v71, %v40
    %73 = vst [vmem:[#allocation7] sm:$0x1] %v72
    %s74 = sld [smem:[#allocation2 + $0x80]]
    %s75 = scalar_lea.vmem [#allocation6], %s74
    %v76 = vld [vmem:[%s75] sm:$0x1]
    %s77 = sld [smem:[#allocation2 + $0x81]]
    %s78 = scalar_lea.vmem [#allocation6], %s77
    %v79 = vld [vmem:[%s78] sm:$0x1]
    %v80 = vmax.f32 %v76, %v79
    %s81 = sld [smem:[#allocation2 + $0x82]]
    %s82 = scalar_lea.vmem [#allocation6], %s81
    %v83 = vld [vmem:[%s82] sm:$0x1]
    %v84 = vmax.f32 %v80, %v83
    %s85 = sld [smem:[#allocation2 + $0x83]]
    %s86 = scalar_lea.vmem [#allocation6], %s85
    %v87 = vld [vmem:[%s86] sm:$0x1]
    %v88 = vmax.f32 %v84, %v87
    %s89 = sld [smem:[#allocation2 + $0x84]]
    %s90 = scalar_lea.vmem [#allocation6], %s89
    %v91 = vld [vmem:[%s90] sm:$0x1]
    %v92 = vmax.f32 %v88, %v91
    %s93 = sld [smem:[#allocation2 + $0x85]]
    %s94 = scalar_lea.vmem [#allocation6], %s93
    %v95 = vld [vmem:[%s94] sm:$0x1]
    %v96 = vmax.f32 %v92, %v95
    %s97 = sld [smem:[#allocation2 + $0x86]]
    %s98 = scalar_lea.vmem [#allocation6], %s97
    %v99 = vld [vmem:[%s98] sm:$0x1]
    %v100 = vmax.f32 %v96, %v99
    %s101 = sld [smem:[#allocation2 + $0x87]]
    %s102 = scalar_lea.vmem [#allocation6], %s101
    %v103 = vld [vmem:[%s102] sm:$0x1]
    %v104 = vmax.f32 %v100, %v103
    %v105 = vadd.f32 %v104, %v40
    %106 = vst [vmem:[#allocation7 + $0x1] sm:$0x1] %v105
    // Predicated region
    $region22: #{tpu_custom_call.1} parent=1 // pred_check
      _
    $region23: #{tpu_custom_call.1} parent=1 // pred_check_branch
      %108 = sbr.rel (0) target = $region25
    $region24: #{tpu_custom_call.1} parent=1 // pred_region
      %s110 = ssub.s32 32, 32
      %111 = vsyncadd [#allocation4], %s110
      %s113 = sshll.u32 [#allocation7], 4
      %s114 = int_to_ptr.vmem [resolvable:$true] %s113
      %116 = dma.vmem_to_hbm [thread:$0]  %s114, 32, %s3, [#allocation4]
    $region25: #{tpu_custom_call.1} parent=1 // pred_fallthru
      _
    // Predicated region
    $region26: #{tpu_custom_call.1} parent=1 // pred_check
      _
    $region27: #{tpu_custom_call.1} parent=1 // pred_check_branch
      %118 = sbr.rel (0) target = $region29
    $region28: #{tpu_custom_call.1} parent=1 // pred_region
      %119 = dma.done [#allocation4], 32
    $region29: #{tpu_custom_call.1} parent=1 // pred_fallthru
      _
    %120 = vsyncpa [#allocation3], 1
    %121 = vsyncpa [#allocation4], 1
    %122 = vsyncpa [#allocation5], 1

</llo_original>
